<compile_context>
chip_gen: v7x
topology: tpu7x:2x2x1
jax: 0.10.0
libtpu: 0.0.40
codegen_flags: <defaults>
</compile_context>

<pallas_src>
import functools

import jax
import jax.numpy as jnp
from jax.experimental import pallas as pl
from jax.experimental.pallas import tpu as pltpu


def _round_up(x, m):
    return (x + m - 1) // m * m


def _pad2(a, rows, cols):
    return jnp.pad(a, ((0, rows - a.shape[0]), (0, cols - a.shape[1])))


def _mean_ae_kernel(x_ref,
                    w1_ref, b1_ref,   # encoder.0 : Linear(E -> H)
                    w2_ref, b2_ref,   # encoder.2 : Linear(H -> D)
                    w3_ref, b3_ref,   # decoder.0 : Linear(D -> H)
                    w4_ref, b4_ref,   # decoder.2 : Linear(H -> E)
                    w5_ref, b5_ref,   # last_fc.0 : Linear(D -> D)
                    vec_ref, vecs_ref, loss_ref,
                    *, nk, elem):
    """One task per grid step. x_ref: (NK_pad, E_pad) f32; weights bf16; biases f32."""
    f32 = jnp.float32
    bf16 = jnp.bfloat16

    x = x_ref[...]                                               # [NKp, Ep] f32

    def linear(a_f32, w_ref, b_ref):
        # bf16 operands on the MXU, f32 accumulation, f32 bias add.
        return jnp.dot(a_f32.astype(bf16), w_ref[...],
                       preferred_element_type=f32) + b_ref[...]

    # ---- encoder: Linear + ReLU, Linear + ReLU ----
    h1 = jnp.maximum(linear(x, w1_ref, b1_ref), 0.0)             # [NKp, Hp]
    task_emb = jnp.maximum(linear(h1, w2_ref, b2_ref), 0.0)      # [NKp, Dp]

    # ---- decoder: Linear + ReLU, Linear (no final ReLU) ----
    d1 = jnp.maximum(linear(task_emb, w3_ref, b3_ref), 0.0)      # [NKp, Hp]
    x_rec = linear(d1, w4_ref, b4_ref)                           # [NKp, Ep]

    nk_pad, ep = x.shape
    dp = vec_ref.shape[-1]

    # Rows >= nk are zero padding; mask them out of every reduction/output.
    mask_e = (jax.lax.broadcasted_iota(jnp.int32, (nk_pad, ep), 0) < nk).astype(f32)
    mask_d = (jax.lax.broadcasted_iota(jnp.int32, (nk_pad, dp), 0) < nk).astype(f32)

    # ---- reconstruction loss: 0.5 * MSE over the TRUE (nk, elem) entries ----
    # Padded feature columns of x and x_rec are exactly zero (zero-padded
    # weights/biases), so only padded rows need masking; divide by true nk*elem.
    diff = (x - x_rec) * mask_e
    loss = jnp.sum(diff * diff) * (0.5 / float(nk * elem))
    loss_ref[...] = jnp.full(loss_ref.shape, loss, dtype=f32)    # lane-dense row

    # ---- last_fc: Linear + ReLU, then mean over the (true) support set ----
    vecs = jnp.maximum(linear(task_emb, w5_ref, b5_ref), 0.0) * mask_d
    vecs_ref[...] = vecs
    vec_ref[...] = jnp.sum(vecs, axis=0, keepdims=True) * (1.0 / float(nk))


def mean_autoencoder_forward(x, params):
    """Forward pass of MeanAutoencoder.

    x: [NK, elem_num] (single task, as in the PyTorch module) or
       [num_tasks, NK, elem_num] (batched tasks -> single pallas_call).
    params: dict of (w, b); w stored pre-transposed as [in, out], b as [1, out].
    """
    single_task = (x.ndim == 2)
    if single_task:
        x = x[None]
    num_tasks, nk, elem = x.shape
    hidden = params["w1"].shape[1]
    emb = params["w2"].shape[1]

    ep = _round_up(elem, 128)     # lane-pad E (69 -> 128)
    hp = _round_up(hidden, 128)   # lane-pad H (96 -> 128)
    dp = _round_up(emb, 128)      # task_emb_dim (already 128)
    nkp = _round_up(nk, 8)        # sublane-pad NK (10 -> 16)

    # Host-side zero-pad to lane/sublane width + bf16 weight cast.
    # (In training code this padding/cast would be done once, outside the step.)
    bf = jnp.bfloat16
    xp = jnp.pad(x.astype(jnp.float32), ((0, 0), (0, nkp - nk), (0, ep - elem)))
    w1 = _pad2(params["w1"], ep, hp).astype(bf)
    b1 = _pad2(params["b1"], 1, hp).astype(jnp.float32)
    w2 = _pad2(params["w2"], hp, dp).astype(bf)
    b2 = _pad2(params["b2"], 1, dp).astype(jnp.float32)
    w3 = _pad2(params["w3"], dp, hp).astype(bf)
    b3 = _pad2(params["b3"], 1, hp).astype(jnp.float32)
    w4 = _pad2(params["w4"], hp, ep).astype(bf)
    b4 = _pad2(params["b4"], 1, ep).astype(jnp.float32)
    w5 = _pad2(params["w5"], dp, dp).astype(bf)
    b5 = _pad2(params["b5"], 1, dp).astype(jnp.float32)
    weights = (w1, b1, w2, b2, w3, b3, w4, b4, w5, b5)

    # Weights: constant index_map -> fetched once, VMEM-resident across all tasks.
    const_spec = lambda a: pl.BlockSpec(a.shape, lambda t: (0, 0))
    in_specs = [pl.BlockSpec((None, nkp, ep), lambda t: (t, 0, 0))]
    in_specs += [const_spec(w) for w in weights]

    out_specs = (
        pl.BlockSpec((None, 1, dp), lambda t: (t, 0, 0)),     # task_emb_vec
        pl.BlockSpec((None, nkp, dp), lambda t: (t, 0, 0)),   # task_emb_vecs
        pl.BlockSpec((None, 1, 128), lambda t: (t, 0, 0)),    # loss (lane-dense row)
    )
    out_shape = (
        jax.ShapeDtypeStruct((num_tasks, 1, dp), jnp.float32),
        jax.ShapeDtypeStruct((num_tasks, nkp, dp), jnp.float32),
        jax.ShapeDtypeStruct((num_tasks, 1, 128), jnp.float32),
    )

    mm = ep * hp + hp * dp + dp * hp + hp * ep + dp * dp
    flops = 2 * num_tasks * nkp * mm
    bytes_accessed = (2 * mm                                   # bf16 weights
                      + 4 * (hp + dp + hp + ep + dp)           # f32 biases
                      + 4 * num_tasks * (nkp * ep + nkp * dp + dp + 128))

    kernel = functools.partial(_mean_ae_kernel, nk=nk, elem=elem)

    vec, vecs, loss = pl.pallas_call(
        kernel,
        out_shape=out_shape,
        grid_spec=pltpu.PrefetchScalarGridSpec(
            num_scalar_prefetch=0,
            grid=(num_tasks,),
            in_specs=in_specs,
            out_specs=out_specs,
        ),
        compiler_params=pltpu.CompilerParams(
            dimension_semantics=("parallel",)),
        cost_estimate=pl.CostEstimate(
            flops=flops, transcendentals=0, bytes_accessed=bytes_accessed),
    )(xp, *weights)

    vec = vec[:, 0, :emb]          # [T, D]
    vecs = vecs[:, :nk, :emb]      # [T, NK, D]
    loss = loss[:, 0, 0]           # [T]
    if single_task:
        # Module-equivalent outputs: ([1, D], [NK, D], scalar)
        return vec, vecs[0], loss[0]
    return vec[:, None, :], vecs, loss


def init_params(key, elem_num, hidden_num, task_emb_dim):
    """Deterministic synthetic init (PyTorch-style uniform fan-in scaling)."""
    def linear(k, fan_in, fan_out):
        kw, kb = jax.random.split(k)
        bound = 1.0 / jnp.sqrt(jnp.float32(fan_in))
        w = jax.random.uniform(kw, (fan_in, fan_out), jnp.float32, -bound, bound)
        b = jax.random.uniform(kb, (1, fan_out), jnp.float32, -bound, bound)
        return w, b

    ks = jax.random.split(key, 5)
    w1, b1 = linear(ks[0], elem_num, hidden_num)        # encoder.0
    w2, b2 = linear(ks[1], hidden_num, task_emb_dim)    # encoder.2
    w3, b3 = linear(ks[2], task_emb_dim, hidden_num)    # decoder.0
    w4, b4 = linear(ks[3], hidden_num, elem_num)        # decoder.2
    w5, b5 = linear(ks[4], task_emb_dim, task_emb_dim)  # last_fc.0
    return dict(w1=w1, b1=b1, w2=w2, b2=b2, w3=w3, b3=b3,
                w4=w4, b4=b4, w5=w5, b5=b5)


def reference_forward_f32(x, p):
    """Pure-f32 JAX reference of the PyTorch module (semantic check)."""
    relu = lambda t: jnp.maximum(t, 0.0)
    te = relu(relu(x @ p["w1"] + p["b1"]) @ p["w2"] + p["b2"])
    x_rec = relu(te @ p["w3"] + p["b3"]) @ p["w4"] + p["b4"]
    loss = 0.5 * jnp.mean((x - x_rec) ** 2)
    vecs = relu(te @ p["w5"] + p["b5"])
    vec = jnp.mean(vecs, axis=0, keepdims=True)
    return vec, vecs, loss


def reference_forward_bf16(x, p):
    """Reference with the SAME mixed precision as the kernel (bf16 matmul
    operands, f32 accumulation, f32 elementwise) for a tight correctness check."""
    bf = jnp.bfloat16
    relu = lambda t: jnp.maximum(t, 0.0)

    def lin(a, w, b):
        return jnp.dot(a.astype(bf), w.astype(bf),
                       preferred_element_type=jnp.float32) + b

    te = relu(lin(relu(lin(x, p["w1"], p["b1"])), p["w2"], p["b2"]))
    x_rec = lin(relu(lin(te, p["w3"], p["b3"])), p["w4"], p["b4"])
    loss = 0.5 * jnp.mean((x - x_rec) ** 2)
    vecs = relu(lin(te, p["w5"], p["b5"]))
    vec = jnp.mean(vecs, axis=0, keepdims=True)
    return vec, vecs, loss


if __name__ == "__main__":
    # Module-consistent small shapes:
    #   N-way = 5  => elem_num = 64 + 5 = 69
    #   NK    = 10 support images, hidden_num = 96, task_emb_dim = 128
    #   num_tasks = 8 tasks batched into one pallas_call.
    num_classes_per_set = 5
    elem_num = 64 + num_classes_per_set
    hidden_num = 96
    task_emb_dim = 128
    nk = 10
    num_tasks = 8

    key = jax.random.PRNGKey(0)
    kx, kp = jax.random.split(key)
    x = jax.random.normal(kx, (num_tasks, nk, elem_num), dtype=jnp.float32)
    params = init_params(kp, elem_num, hidden_num, task_emb_dim)

    fwd = jax.jit(mean_autoencoder_forward)
    vec, vecs, loss = fwd(x, params)
    jax.block_until_ready((vec, vecs, loss))

    assert vec.shape == (num_tasks, 1, task_emb_dim)
    assert vecs.shape == (num_tasks, nk, task_emb_dim)
    assert loss.shape == (num_tasks,)

    # Per-task checks: tight vs. a precision-matched reference, loose vs. the
    # pure-f32 module semantics (bf16 matmuls introduce ~1% relative error).
    for t in range(num_tasks):
        rvec, rvecs, rloss = reference_forward_bf16(x[t], params)
        assert jnp.allclose(vec[t, 0], rvec[0], atol=1e-3, rtol=1e-3)
        assert jnp.allclose(vecs[t], rvecs, atol=1e-3, rtol=1e-3)
        assert jnp.allclose(loss[t], rloss, atol=1e-3, rtol=1e-3)

        fvec, fvecs, floss = reference_forward_f32(x[t], params)
        assert jnp.allclose(vec[t, 0], fvec[0], atol=2e-2, rtol=2e-2)
        assert jnp.allclose(vecs[t], fvecs, atol=2e-2, rtol=2e-2)
        assert jnp.allclose(loss[t], floss, atol=2e-2, rtol=2e-2)

    # Single-task path (module-equivalent API) still works and agrees.
    svec, svecs, sloss = mean_autoencoder_forward(x[0], params)
    assert svec.shape == (1, task_emb_dim)
    assert svecs.shape == (nk, task_emb_dim)
    assert jnp.allclose(svec, vec[0], atol=1e-6)
    assert jnp.allclose(svecs, vecs[0], atol=1e-6)
    assert jnp.allclose(sloss, loss[0], atol=1e-6)

    print("KERNEL_OK")
</pallas_src>

<mosaic_0001>
module attributes {stable_mosaic.version = 11 : i64} {
  func.func @_mean_ae_kernel(%arg0: i32, %arg1: memref<1x16x128xf32, #tpu.memory_space<vmem>>, %arg2: memref<128x128xbf16, #tpu.memory_space<vmem>>, %arg3: memref<1x128xf32, #tpu.memory_space<vmem>>, %arg4: memref<128x128xbf16, #tpu.memory_space<vmem>>, %arg5: memref<1x128xf32, #tpu.memory_space<vmem>>, %arg6: memref<128x128xbf16, #tpu.memory_space<vmem>>, %arg7: memref<1x128xf32, #tpu.memory_space<vmem>>, %arg8: memref<128x128xbf16, #tpu.memory_space<vmem>>, %arg9: memref<1x128xf32, #tpu.memory_space<vmem>>, %arg10: memref<128x128xbf16, #tpu.memory_space<vmem>>, %arg11: memref<1x128xf32, #tpu.memory_space<vmem>>, %arg12: memref<1x1x128xf32, #tpu.memory_space<vmem>>, %arg13: memref<1x16x128xf32, #tpu.memory_space<vmem>>, %arg14: memref<1x1x128xf32, #tpu.memory_space<vmem>>) attributes {dimension_semantics = [#tpu.dimension_semantics<parallel>], iteration_bounds = array<i64: 8>, scalar_prefetch = 0 : i64, scratch_operands = 0 : i64, tpu.core_type = #tpu.core_type<tc>, window_params = [{transform_indices = @transform_0, window_bounds = array<i64: 1, 16, 128>}, {pipeline_mode = #tpu.pipeline_mode<synchronous>, transform_indices = @transform_1, window_bounds = array<i64: 128, 128>}, {pipeline_mode = #tpu.pipeline_mode<synchronous>, transform_indices = @transform_2, window_bounds = array<i64: 1, 128>}, {pipeline_mode = #tpu.pipeline_mode<synchronous>, transform_indices = @transform_3, window_bounds = array<i64: 128, 128>}, {pipeline_mode = #tpu.pipeline_mode<synchronous>, transform_indices = @transform_4, window_bounds = array<i64: 1, 128>}, {pipeline_mode = #tpu.pipeline_mode<synchronous>, transform_indices = @transform_5, window_bounds = array<i64: 128, 128>}, {pipeline_mode = #tpu.pipeline_mode<synchronous>, transform_indices = @transform_6, window_bounds = array<i64: 1, 128>}, {pipeline_mode = #tpu.pipeline_mode<synchronous>, transform_indices = @transform_7, window_bounds = array<i64: 128, 128>}, {pipeline_mode = #tpu.pipeline_mode<synchronous>, transform_indices = @transform_8, window_bounds = array<i64: 1, 128>}, {pipeline_mode = #tpu.pipeline_mode<synchronous>, transform_indices = @transform_9, window_bounds = array<i64: 128, 128>}, {pipeline_mode = #tpu.pipeline_mode<synchronous>, transform_indices = @transform_10, window_bounds = array<i64: 1, 128>}, {transform_indices = @transform_11, window_bounds = array<i64: 1, 1, 128>}, {transform_indices = @transform_12, window_bounds = array<i64: 1, 16, 128>}, {transform_indices = @transform_13, window_bounds = array<i64: 1, 1, 128>}]} {
    %c0 = arith.constant 0 : index
    %c0_0 = arith.constant 0 : index
    %c0_1 = arith.constant 0 : index
    %0 = vector.load %arg1[%c0, %c0_0, %c0_1] : memref<1x16x128xf32, #tpu.memory_space<vmem>>, vector<1x16x128xf32>
    %1 = vector.shape_cast %0 : vector<1x16x128xf32> to vector<16x128xf32>
    %2 = arith.truncf %1 : vector<16x128xf32> to vector<16x128xbf16>
    %c0_2 = arith.constant 0 : index
    %c0_3 = arith.constant 0 : index
    %3 = vector.load %arg2[%c0_2, %c0_3] : memref<128x128xbf16, #tpu.memory_space<vmem>>, vector<128x128xbf16>
    %cst = arith.constant dense<0.000000e+00> : vector<16x128xf32>
    %4 = tpu.matmul %2, %3, %cst {dimension_numbers = #tpu.dot_dimension_numbers<[1], [0], [0], [1], [0, 0, 1, 1], [], []>} : vector<16x128xbf16>, vector<128x128xbf16>, vector<16x128xf32> -> vector<16x128xf32>
    %c0_4 = arith.constant 0 : index
    %c0_5 = arith.constant 0 : index
    %5 = vector.load %arg3[%c0_4, %c0_5] : memref<1x128xf32, #tpu.memory_space<vmem>>, vector<1x128xf32>
    %6 = vector.broadcast %5 : vector<1x128xf32> to vector<16x128xf32>
    %7 = arith.addf %4, %6 : vector<16x128xf32>
    %cst_6 = arith.constant 0.000000e+00 : f32
    %8 = vector.broadcast %cst_6 : f32 to vector<16x128xf32>
    %9 = arith.maximumf %7, %8 : vector<16x128xf32>
    %10 = arith.truncf %9 : vector<16x128xf32> to vector<16x128xbf16>
    %c0_7 = arith.constant 0 : index
    %c0_8 = arith.constant 0 : index
    %11 = vector.load %arg4[%c0_7, %c0_8] : memref<128x128xbf16, #tpu.memory_space<vmem>>, vector<128x128xbf16>
    %cst_9 = arith.constant dense<0.000000e+00> : vector<16x128xf32>
    %12 = tpu.matmul %10, %11, %cst_9 {dimension_numbers = #tpu.dot_dimension_numbers<[1], [0], [0], [1], [0, 0, 1, 1], [], []>} : vector<16x128xbf16>, vector<128x128xbf16>, vector<16x128xf32> -> vector<16x128xf32>
    %c0_10 = arith.constant 0 : index
    %c0_11 = arith.constant 0 : index
    %13 = vector.load %arg5[%c0_10, %c0_11] : memref<1x128xf32, #tpu.memory_space<vmem>>, vector<1x128xf32>
    %14 = vector.broadcast %13 : vector<1x128xf32> to vector<16x128xf32>
    %15 = arith.addf %12, %14 : vector<16x128xf32>
    %cst_12 = arith.constant 0.000000e+00 : f32
    %16 = vector.broadcast %cst_12 : f32 to vector<16x128xf32>
    %17 = arith.maximumf %15, %16 : vector<16x128xf32>
    %18 = arith.truncf %17 : vector<16x128xf32> to vector<16x128xbf16>
    %c0_13 = arith.constant 0 : index
    %c0_14 = arith.constant 0 : index
    %19 = vector.load %arg6[%c0_13, %c0_14] : memref<128x128xbf16, #tpu.memory_space<vmem>>, vector<128x128xbf16>
    %cst_15 = arith.constant dense<0.000000e+00> : vector<16x128xf32>
    %20 = tpu.matmul %18, %19, %cst_15 {dimension_numbers = #tpu.dot_dimension_numbers<[1], [0], [0], [1], [0, 0, 1, 1], [], []>} : vector<16x128xbf16>, vector<128x128xbf16>, vector<16x128xf32> -> vector<16x128xf32>
    %c0_16 = arith.constant 0 : index
    %c0_17 = arith.constant 0 : index
    %21 = vector.load %arg7[%c0_16, %c0_17] : memref<1x128xf32, #tpu.memory_space<vmem>>, vector<1x128xf32>
    %22 = vector.broadcast %21 : vector<1x128xf32> to vector<16x128xf32>
    %23 = arith.addf %20, %22 : vector<16x128xf32>
    %cst_18 = arith.constant 0.000000e+00 : f32
    %24 = vector.broadcast %cst_18 : f32 to vector<16x128xf32>
    %25 = arith.maximumf %23, %24 : vector<16x128xf32>
    %26 = arith.truncf %25 : vector<16x128xf32> to vector<16x128xbf16>
    %c0_19 = arith.constant 0 : index
    %c0_20 = arith.constant 0 : index
    %27 = vector.load %arg8[%c0_19, %c0_20] : memref<128x128xbf16, #tpu.memory_space<vmem>>, vector<128x128xbf16>
    %cst_21 = arith.constant dense<0.000000e+00> : vector<16x128xf32>
    %28 = tpu.matmul %26, %27, %cst_21 {dimension_numbers = #tpu.dot_dimension_numbers<[1], [0], [0], [1], [0, 0, 1, 1], [], []>} : vector<16x128xbf16>, vector<128x128xbf16>, vector<16x128xf32> -> vector<16x128xf32>
    %c0_22 = arith.constant 0 : index
    %c0_23 = arith.constant 0 : index
    %29 = vector.load %arg9[%c0_22, %c0_23] : memref<1x128xf32, #tpu.memory_space<vmem>>, vector<1x128xf32>
    %30 = vector.broadcast %29 : vector<1x128xf32> to vector<16x128xf32>
    %31 = arith.addf %28, %30 : vector<16x128xf32>
    %32 = tpu.iota {dimensions = array<i32: 0>} : vector<16x128xi32>
    %c10_i32 = arith.constant 10 : i32
    %33 = vector.broadcast %c10_i32 : i32 to vector<16x128xi32>
    %34 = arith.cmpi slt, %32, %33 : vector<16x128xi32>
    %35 = arith.extui %34 : vector<16x128xi1> to vector<16x128xi32>
    %36 = arith.sitofp %35 : vector<16x128xi32> to vector<16x128xf32>
    %37 = tpu.iota {dimensions = array<i32: 0>} : vector<16x128xi32>
    %c10_i32_24 = arith.constant 10 : i32
    %38 = vector.broadcast %c10_i32_24 : i32 to vector<16x128xi32>
    %39 = arith.cmpi slt, %37, %38 : vector<16x128xi32>
    %40 = arith.extui %39 : vector<16x128xi1> to vector<16x128xi32>
    %41 = arith.sitofp %40 : vector<16x128xi32> to vector<16x128xf32>
    %42 = arith.subf %1, %31 : vector<16x128xf32>
    %43 = arith.mulf %42, %36 : vector<16x128xf32>
    %44 = arith.mulf %43, %43 : vector<16x128xf32>
    %45 = vector.shape_cast %44 : vector<16x128xf32> to vector<1x16x128xf32>
    %cst_25 = arith.constant dense<0.000000e+00> : vector<1xf32>
    %46 = vector.multi_reduction <add>, %45, %cst_25 [1, 2] : vector<1x16x128xf32> to vector<1xf32>
    %47 = vector.shape_cast %46 : vector<1xf32> to vector<1x1x1xf32>
    %48 = vector.extract %47[0, 0, 0] : f32 from vector<1x1x1xf32>
    %cst_26 = arith.constant 7.24637706E-4 : f32
    %49 = arith.mulf %48, %cst_26 : f32
    %50 = vector.broadcast %49 : f32 to vector<1x128xf32>
    %c0_27 = arith.constant 0 : index
    %c0_28 = arith.constant 0 : index
    %c0_29 = arith.constant 0 : index
    %51 = vector.load %arg14[%c0_27, %c0_28, %c0_29] : memref<1x1x128xf32, #tpu.memory_space<vmem>>, vector<1x1x128xf32>
    %52 = vector.shape_cast %51 : vector<1x1x128xf32> to vector<1x128xf32>
    %53 = vector.shape_cast %50 : vector<1x128xf32> to vector<1x1x128xf32>
    tpu.vector_store %arg14[%c0_27, %c0_28, %c0_29], %53 {strides = array<i32>} : memref<1x1x128xf32, #tpu.memory_space<vmem>>, vector<1x1x128xf32>,
    %54 = arith.truncf %17 : vector<16x128xf32> to vector<16x128xbf16>
    %c0_30 = arith.constant 0 : index
    %c0_31 = arith.constant 0 : index
    %55 = vector.load %arg10[%c0_30, %c0_31] : memref<128x128xbf16, #tpu.memory_space<vmem>>, vector<128x128xbf16>
    %cst_32 = arith.constant dense<0.000000e+00> : vector<16x128xf32>
    %56 = tpu.matmul %54, %55, %cst_32 {dimension_numbers = #tpu.dot_dimension_numbers<[1], [0], [0], [1], [0, 0, 1, 1], [], []>} : vector<16x128xbf16>, vector<128x128xbf16>, vector<16x128xf32> -> vector<16x128xf32>
    %c0_33 = arith.constant 0 : index
    %c0_34 = arith.constant 0 : index
    %57 = vector.load %arg11[%c0_33, %c0_34] : memref<1x128xf32, #tpu.memory_space<vmem>>, vector<1x128xf32>
    %58 = vector.broadcast %57 : vector<1x128xf32> to vector<16x128xf32>
    %59 = arith.addf %56, %58 : vector<16x128xf32>
    %cst_35 = arith.constant 0.000000e+00 : f32
    %60 = vector.broadcast %cst_35 : f32 to vector<16x128xf32>
    %61 = arith.maximumf %59, %60 : vector<16x128xf32>
    %62 = arith.mulf %61, %41 : vector<16x128xf32>
    %c0_36 = arith.constant 0 : index
    %c0_37 = arith.constant 0 : index
    %c0_38 = arith.constant 0 : index
    %63 = vector.load %arg13[%c0_36, %c0_37, %c0_38] : memref<1x16x128xf32, #tpu.memory_space<vmem>>, vector<1x16x128xf32>
    %64 = vector.shape_cast %63 : vector<1x16x128xf32> to vector<16x128xf32>
    %65 = vector.shape_cast %62 : vector<16x128xf32> to vector<1x16x128xf32>
    tpu.vector_store %arg13[%c0_36, %c0_37, %c0_38], %65 {strides = array<i32>} : memref<1x16x128xf32, #tpu.memory_space<vmem>>, vector<1x16x128xf32>,
    %cst_39 = arith.constant dense<0.000000e+00> : vector<128xf32>
    %66 = vector.multi_reduction <add>, %62, %cst_39 [0] : vector<16x128xf32> to vector<128xf32>
    %67 = vector.shape_cast %66 : vector<128xf32> to vector<1x128xf32>
    %cst_40 = arith.constant 1.000000e-01 : f32
    %68 = vector.broadcast %cst_40 : f32 to vector<1x128xf32>
    %69 = arith.mulf %67, %68 : vector<1x128xf32>
    %c0_41 = arith.constant 0 : index
    %c0_42 = arith.constant 0 : index
    %c0_43 = arith.constant 0 : index
    %70 = vector.load %arg12[%c0_41, %c0_42, %c0_43] : memref<1x1x128xf32, #tpu.memory_space<vmem>>, vector<1x1x128xf32>
    %71 = vector.shape_cast %70 : vector<1x1x128xf32> to vector<1x128xf32>
    %72 = vector.shape_cast %69 : vector<1x128xf32> to vector<1x1x128xf32>
    tpu.vector_store %arg12[%c0_41, %c0_42, %c0_43], %72 {strides = array<i32>} : memref<1x1x128xf32, #tpu.memory_space<vmem>>, vector<1x1x128xf32>,
    return
  }
  func.func @transform_0(%arg0: i32) -> (i32, i32, i32) {
    %c0_i32 = arith.constant 0 : i32
    %c0_i32_0 = arith.constant 0 : i32
    %c0_i32_1 = arith.constant 0 : i32
    return %arg0, %c0_i32, %c0_i32_0 : i32, i32, i32
  }
  func.func @transform_1(%arg0: i32) -> (i32, i32) {
    %c0_i32 = arith.constant 0 : i32
    %c0_i32_0 = arith.constant 0 : i32
    %c0_i32_1 = arith.constant 0 : i32
    return %c0_i32, %c0_i32_0 : i32, i32
  }
  func.func @transform_2(%arg0: i32) -> (i32, i32) {
    %c0_i32 = arith.constant 0 : i32
    %c0_i32_0 = arith.constant 0 : i32
    %c0_i32_1 = arith.constant 0 : i32
    return %c0_i32, %c0_i32_0 : i32, i32
  }
  func.func @transform_3(%arg0: i32) -> (i32, i32) {
    %c0_i32 = arith.constant 0 : i32
    %c0_i32_0 = arith.constant 0 : i32
    %c0_i32_1 = arith.constant 0 : i32
    return %c0_i32, %c0_i32_0 : i32, i32
  }
  func.func @transform_4(%arg0: i32) -> (i32, i32) {
    %c0_i32 = arith.constant 0 : i32
    %c0_i32_0 = arith.constant 0 : i32
    %c0_i32_1 = arith.constant 0 : i32
    return %c0_i32, %c0_i32_0 : i32, i32
  }
  func.func @transform_5(%arg0: i32) -> (i32, i32) {
    %c0_i32 = arith.constant 0 : i32
    %c0_i32_0 = arith.constant 0 : i32
    %c0_i32_1 = arith.constant 0 : i32
    return %c0_i32, %c0_i32_0 : i32, i32
  }
  func.func @transform_6(%arg0: i32) -> (i32, i32) {
    %c0_i32 = arith.constant 0 : i32
    %c0_i32_0 = arith.constant 0 : i32
    %c0_i32_1 = arith.constant 0 : i32
    return %c0_i32, %c0_i32_0 : i32, i32
  }
  func.func @transform_7(%arg0: i32) -> (i32, i32) {
    %c0_i32 = arith.constant 0 : i32
    %c0_i32_0 = arith.constant 0 : i32
    %c0_i32_1 = arith.constant 0 : i32
    return %c0_i32, %c0_i32_0 : i32, i32
  }
  func.func @transform_8(%arg0: i32) -> (i32, i32) {
    %c0_i32 = arith.constant 0 : i32
    %c0_i32_0 = arith.constant 0 : i32
    %c0_i32_1 = arith.constant 0 : i32
    return %c0_i32, %c0_i32_0 : i32, i32
  }
  func.func @transform_9(%arg0: i32) -> (i32, i32) {
    %c0_i32 = arith.constant 0 : i32
    %c0_i32_0 = arith.constant 0 : i32
    %c0_i32_1 = arith.constant 0 : i32
    return %c0_i32, %c0_i32_0 : i32, i32
  }
  func.func @transform_10(%arg0: i32) -> (i32, i32) {
    %c0_i32 = arith.constant 0 : i32
    %c0_i32_0 = arith.constant 0 : i32
    %c0_i32_1 = arith.constant 0 : i32
    return %c0_i32, %c0_i32_0 : i32, i32
  }
  func.func @transform_11(%arg0: i32) -> (i32, i32, i32) {
    %c0_i32 = arith.constant 0 : i32
    %c0_i32_0 = arith.constant 0 : i32
    %c0_i32_1 = arith.constant 0 : i32
    return %arg0, %c0_i32, %c0_i32_0 : i32, i32, i32
  }
  func.func @transform_12(%arg0: i32) -> (i32, i32, i32) {
    %c0_i32 = arith.constant 0 : i32
    %c0_i32_0 = arith.constant 0 : i32
    %c0_i32_1 = arith.constant 0 : i32
    return %arg0, %c0_i32, %c0_i32_0 : i32, i32, i32
  }
  func.func @transform_13(%arg0: i32) -> (i32, i32, i32) {
    %c0_i32 = arith.constant 0 : i32
    %c0_i32_0 = arith.constant 0 : i32
    %c0_i32_1 = arith.constant 0 : i32
    return %arg0, %c0_i32, %c0_i32_0 : i32, i32, i32
  }
}

</mosaic_0001>

<llo_original>
// kernel: mean_autoencoder_forward.1
$region0: #{mean_autoencoder_forward.1}
  #allocation0 [shape = 'u32[]', space=smem, size = 0x4, offset = 0x4, fixed_abs, tag = 'smem constant byte address 0x4 - core index']
  #allocation1 [shape = 'u32[144,128]{1,0:T(1,128)}', space=vmem, size = 0x12000, scoped, tag = 'internal scratch']
  %s0 = inlined_call_operand.vmem [shape: f32[8,16,128], index: 0, kind: input, shape index: {}]
  %s1 = inlined_call_operand.vmem [shape: bf16[128,128], index: 1, kind: input, shape index: {}]
  %s2 = inlined_call_operand.vmem [shape: f32[1,128], index: 2, kind: input, shape index: {}]
  %s3 = inlined_call_operand.vmem [shape: bf16[128,128], index: 3, kind: input, shape index: {}]
  %s4 = inlined_call_operand.vmem [shape: f32[1,128], index: 4, kind: input, shape index: {}]
  %s5 = inlined_call_operand.vmem [shape: bf16[128,128], index: 5, kind: input, shape index: {}]
  %s6 = inlined_call_operand.vmem [shape: f32[1,128], index: 6, kind: input, shape index: {}]
  %s7 = inlined_call_operand.vmem [shape: bf16[128,128], index: 7, kind: input, shape index: {}]
  %s8 = inlined_call_operand.vmem [shape: f32[1,128], index: 8, kind: input, shape index: {}]
  %s9 = inlined_call_operand.vmem [shape: bf16[128,128], index: 9, kind: input, shape index: {}]
  %s10 = inlined_call_operand.vmem [shape: f32[1,128], index: 10, kind: input, shape index: {}]
  %s11 = inlined_call_operand.hbm [shape: f32[8,1,128], index: 11, kind: output, shape index: {0}]
  %s12 = inlined_call_operand.vmem [shape: f32[8,16,128], index: 12, kind: output, shape index: {1}]
  %s13 = inlined_call_operand.vmem [shape: f32[8,1,128], index: 13, kind: output, shape index: {2}]
  %14 = xla_tuple %s11, %s12, %s13
  %s15 = sld [smem:[#allocation0]]
  $region93: #{mean_autoencoder_forward.1} parent=0
    _
  %s17 = ssub.s32 1, %s15
  %s18 = scalar_select 0, %s17, %s15
  $region1: #{mean_autoencoder_forward.1} parent=0
    #allocation2 [shape = 'u8[1024]{0}', space=vmem, size = 0x400, scoped, tag = 'output window, operand 0']
    #allocation3 [shape = 's32[2]{0}', space=sflag, size = 0x8, scoped, tag = 'scoped memory for mean_autoencoder_forward.1']
    %19 = vsyncpa [#allocation3], 0
    %s20 = scalar_lea.sflag [#allocation3], 1
    %21 = vsyncpa %s20, 0
    loop: start=0, step=1, limit=10
    $region2: #{mean_autoencoder_forward.1} parent=1 // loop_pre_header
      _
    $region3: #{mean_autoencoder_forward.1} parent=1 // loop_header
      %s23 = sphi 0, %s27
      %p24 = scmp.ge.s32.totalorder %s23, 10
      %s33 = sphi 0, %s35
      %s36 = sphi 0, %s33
      %s37 = sphi 0, %s36
      %s53 = sphi 0, %s37
      %s57 = sphi 0, %s57
      %s59 = sphi 0, %s57
      %s60 = sphi 0, %s59
      %s74 = sphi 0, %s60
      %s78 = sphi 0, %s78
      %s80 = sphi 0, %s78
      %s81 = sphi 0, %s80
      %s95 = sphi 0, %s81
      %s99 = sphi 0, %s99
      %s101 = sphi 0, %s99
      %s102 = sphi 0, %s101
      %s116 = sphi 0, %s102
      %s120 = sphi 0, %s120
      %s122 = sphi 0, %s120
      %s123 = sphi 0, %s122
      %s137 = sphi 0, %s123
      %s141 = sphi 0, %s141
      %s143 = sphi 0, %s141
      %s144 = sphi 0, %s143
      %s158 = sphi 0, %s144
      %s162 = sphi 0, %s162
      %s164 = sphi 0, %s162
      %s165 = sphi 0, %s164
      %s179 = sphi 0, %s165
      %s183 = sphi 0, %s183
      %s185 = sphi 0, %s183
      %s186 = sphi 0, %s185
      %s200 = sphi 0, %s186
      %s204 = sphi 0, %s204
      %s206 = sphi 0, %s204
      %s207 = sphi 0, %s206
      %s221 = sphi 0, %s207
      %s225 = sphi 0, %s225
      %s227 = sphi 0, %s225
      %s228 = sphi 0, %s227
      %s242 = sphi 0, %s228
      %s246 = sphi 0, %s246
      %s248 = sphi 0, %s246
      %s249 = sphi 0, %s248
      %s263 = sphi 0, %s249
      %s269 = sphi 0, %s271
      %s272 = sphi 0, %s269
      %s273 = sphi 0, %s272
      %s289 = sphi 0, %s273
      %s295 = sphi 0, %s297
      %s298 = sphi 0, %s295
      %s299 = sphi 0, %s298
      %s315 = sphi 0, %s299
      %s321 = sphi 0, %s323
      %s324 = sphi 0, %s321
      %s325 = sphi 0, %s324
      %s341 = sphi 0, %s325
    $region4: #{mean_autoencoder_forward.1} parent=1 // loop_header_branch
      %26 = sbr.rel (%p24) target = $region8
    $region5: #{mean_autoencoder_forward.1} parent=1 // loop_body
      %s28 = ssub.s32 %s23, 1
      %s29 = ssub.s32 %s23, 2
      %s30 = sadd.s32 %s23, 1
      %s31 = ssub.s32 %s23, %s30
      %p32 = scmp.eq.s32.totalorder %s31, 0
      %s34 = sadd.s32 %s33, 1
      %s35 = scalar_select %p32, %s33, %s34
      %p38 = pneg %p32
      %p39 = scmp.eq.s32.totalorder %s23, 7
      %p40 = por %p38, %p39
      %p41 = scmp.ne.s32.totalorder %s33, %s36
      %p42 = scmp.eq.s32.totalorder %s23, 0
      %p43 = por %p41, %p42
      %p44 = scmp.ne.s32.totalorder %s33, %s36
      %p45 = scmp.eq.s32.totalorder %s28, 7
      %p46 = por %p44, %p45
      %p47 = scmp.ne.s32.totalorder %s36, %s37
      %p48 = scmp.eq.s32.totalorder %s28, 0
      %p49 = por %p47, %p48
      %p50 = scmp.ne.s32.totalorder %s36, %s37
      %p51 = scmp.eq.s32.totalorder %s29, 7
      %p52 = por %p50, %p51
      %p54 = scmp.ne.s32.totalorder %s37, %s53
      %p55 = scmp.eq.s32.totalorder %s29, 0
      %p56 = por %p54, %p55
      %s58 = sadd.s32 %s57, 1
      %p61 = scmp.eq.s32.totalorder %s23, 7
      %p62 = scmp.ne.s32.totalorder %s57, %s59
      %p63 = scmp.eq.s32.totalorder %s23, 0
      %p64 = por %p62, %p63
      %p65 = scmp.ne.s32.totalorder %s57, %s59
      %p66 = scmp.eq.s32.totalorder %s28, 7
      %p67 = por %p65, %p66
      %p68 = scmp.ne.s32.totalorder %s59, %s60
      %p69 = scmp.eq.s32.totalorder %s28, 0
      %p70 = por %p68, %p69
      %p71 = scmp.ne.s32.totalorder %s59, %s60
      %p72 = scmp.eq.s32.totalorder %s29, 7
      %p73 = por %p71, %p72
      %p75 = scmp.ne.s32.totalorder %s60, %s74
      %p76 = scmp.eq.s32.totalorder %s29, 0
      %p77 = por %p75, %p76
      %s79 = sadd.s32 %s78, 1
      %p82 = scmp.eq.s32.totalorder %s23, 7
      %p83 = scmp.ne.s32.totalorder %s78, %s80
      %p84 = scmp.eq.s32.totalorder %s23, 0
      %p85 = por %p83, %p84
      %p86 = scmp.ne.s32.totalorder %s78, %s80
      %p87 = scmp.eq.s32.totalorder %s28, 7
      %p88 = por %p86, %p87
      %p89 = scmp.ne.s32.totalorder %s80, %s81
      %p90 = scmp.eq.s32.totalorder %s28, 0
      %p91 = por %p89, %p90
      %p92 = scmp.ne.s32.totalorder %s80, %s81
      %p93 = scmp.eq.s32.totalorder %s29, 7
      %p94 = por %p92, %p93
      %p96 = scmp.ne.s32.totalorder %s81, %s95
      %p97 = scmp.eq.s32.totalorder %s29, 0
      %p98 = por %p96, %p97
      %s100 = sadd.s32 %s99, 1
      %p103 = scmp.eq.s32.totalorder %s23, 7
      %p104 = scmp.ne.s32.totalorder %s99, %s101
      %p105 = scmp.eq.s32.totalorder %s23, 0
      %p106 = por %p104, %p105
      %p107 = scmp.ne.s32.totalorder %s99, %s101
      %p108 = scmp.eq.s32.totalorder %s28, 7
      %p109 = por %p107, %p108
      %p110 = scmp.ne.s32.totalorder %s101, %s102
      %p111 = scmp.eq.s32.totalorder %s28, 0
      %p112 = por %p110, %p111
      %p113 = scmp.ne.s32.totalorder %s101, %s102
      %p114 = scmp.eq.s32.totalorder %s29, 7
      %p115 = por %p113, %p114
      %p117 = scmp.ne.s32.totalorder %s102, %s116
      %p118 = scmp.eq.s32.totalorder %s29, 0
      %p119 = por %p117, %p118
      %s121 = sadd.s32 %s120, 1
      %p124 = scmp.eq.s32.totalorder %s23, 7
      %p125 = scmp.ne.s32.totalorder %s120, %s122
      %p126 = scmp.eq.s32.totalorder %s23, 0
      %p127 = por %p125, %p126
      %p128 = scmp.ne.s32.totalorder %s120, %s122
      %p129 = scmp.eq.s32.totalorder %s28, 7
      %p130 = por %p128, %p129
      %p131 = scmp.ne.s32.totalorder %s122, %s123
      %p132 = scmp.eq.s32.totalorder %s28, 0
      %p133 = por %p131, %p132
      %p134 = scmp.ne.s32.totalorder %s122, %s123
      %p135 = scmp.eq.s32.totalorder %s29, 7
      %p136 = por %p134, %p135
      %p138 = scmp.ne.s32.totalorder %s123, %s137
      %p139 = scmp.eq.s32.totalorder %s29, 0
      %p140 = por %p138, %p139
      %s142 = sadd.s32 %s141, 1
      %p145 = scmp.eq.s32.totalorder %s23, 7
      %p146 = scmp.ne.s32.totalorder %s141, %s143
      %p147 = scmp.eq.s32.totalorder %s23, 0
      %p148 = por %p146, %p147
      %p149 = scmp.ne.s32.totalorder %s141, %s143
      %p150 = scmp.eq.s32.totalorder %s28, 7
      %p151 = por %p149, %p150
      %p152 = scmp.ne.s32.totalorder %s143, %s144
      %p153 = scmp.eq.s32.totalorder %s28, 0
      %p154 = por %p152, %p153
      %p155 = scmp.ne.s32.totalorder %s143, %s144
      %p156 = scmp.eq.s32.totalorder %s29, 7
      %p157 = por %p155, %p156
      %p159 = scmp.ne.s32.totalorder %s144, %s158
      %p160 = scmp.eq.s32.totalorder %s29, 0
      %p161 = por %p159, %p160
      %s163 = sadd.s32 %s162, 1
      %p166 = scmp.eq.s32.totalorder %s23, 7
      %p167 = scmp.ne.s32.totalorder %s162, %s164
      %p168 = scmp.eq.s32.totalorder %s23, 0
      %p169 = por %p167, %p168
      %p170 = scmp.ne.s32.totalorder %s162, %s164
      %p171 = scmp.eq.s32.totalorder %s28, 7
      %p172 = por %p170, %p171
      %p173 = scmp.ne.s32.totalorder %s164, %s165
      %p174 = scmp.eq.s32.totalorder %s28, 0
      %p175 = por %p173, %p174
      %p176 = scmp.ne.s32.totalorder %s164, %s165
      %p177 = scmp.eq.s32.totalorder %s29, 7
      %p178 = por %p176, %p177
      %p180 = scmp.ne.s32.totalorder %s165, %s179
      %p181 = scmp.eq.s32.totalorder %s29, 0
      %p182 = por %p180, %p181
      %s184 = sadd.s32 %s183, 1
      %p187 = scmp.eq.s32.totalorder %s23, 7
      %p188 = scmp.ne.s32.totalorder %s183, %s185
      %p189 = scmp.eq.s32.totalorder %s23, 0
      %p190 = por %p188, %p189
      %p191 = scmp.ne.s32.totalorder %s183, %s185
      %p192 = scmp.eq.s32.totalorder %s28, 7
      %p193 = por %p191, %p192
      %p194 = scmp.ne.s32.totalorder %s185, %s186
      %p195 = scmp.eq.s32.totalorder %s28, 0
      %p196 = por %p194, %p195
      %p197 = scmp.ne.s32.totalorder %s185, %s186
      %p198 = scmp.eq.s32.totalorder %s29, 7
      %p199 = por %p197, %p198
      %p201 = scmp.ne.s32.totalorder %s186, %s200
      %p202 = scmp.eq.s32.totalorder %s29, 0
      %p203 = por %p201, %p202
      %s205 = sadd.s32 %s204, 1
      %p208 = scmp.eq.s32.totalorder %s23, 7
      %p209 = scmp.ne.s32.totalorder %s204, %s206
      %p210 = scmp.eq.s32.totalorder %s23, 0
      %p211 = por %p209, %p210
      %p212 = scmp.ne.s32.totalorder %s204, %s206
      %p213 = scmp.eq.s32.totalorder %s28, 7
      %p214 = por %p212, %p213
      %p215 = scmp.ne.s32.totalorder %s206, %s207
      %p216 = scmp.eq.s32.totalorder %s28, 0
      %p217 = por %p215, %p216
      %p218 = scmp.ne.s32.totalorder %s206, %s207
      %p219 = scmp.eq.s32.totalorder %s29, 7
      %p220 = por %p218, %p219
      %p222 = scmp.ne.s32.totalorder %s207, %s221
      %p223 = scmp.eq.s32.totalorder %s29, 0
      %p224 = por %p222, %p223
      %s226 = sadd.s32 %s225, 1
      %p229 = scmp.eq.s32.totalorder %s23, 7
      %p230 = scmp.ne.s32.totalorder %s225, %s227
      %p231 = scmp.eq.s32.totalorder %s23, 0
      %p232 = por %p230, %p231
      %p233 = scmp.ne.s32.totalorder %s225, %s227
      %p234 = scmp.eq.s32.totalorder %s28, 7
      %p235 = por %p233, %p234
      %p236 = scmp.ne.s32.totalorder %s227, %s228
      %p237 = scmp.eq.s32.totalorder %s28, 0
      %p238 = por %p236, %p237
      %p239 = scmp.ne.s32.totalorder %s227, %s228
      %p240 = scmp.eq.s32.totalorder %s29, 7
      %p241 = por %p239, %p240
      %p243 = scmp.ne.s32.totalorder %s228, %s242
      %p244 = scmp.eq.s32.totalorder %s29, 0
      %p245 = por %p243, %p244
      %s247 = sadd.s32 %s246, 1
      %p250 = scmp.eq.s32.totalorder %s23, 7
      %p251 = scmp.ne.s32.totalorder %s246, %s248
      %p252 = scmp.eq.s32.totalorder %s23, 0
      %p253 = por %p251, %p252
      %p254 = scmp.ne.s32.totalorder %s246, %s248
      %p255 = scmp.eq.s32.totalorder %s28, 7
      %p256 = por %p254, %p255
      %p257 = scmp.ne.s32.totalorder %s248, %s249
      %p258 = scmp.eq.s32.totalorder %s28, 0
      %p259 = por %p257, %p258
      %p260 = scmp.ne.s32.totalorder %s248, %s249
      %p261 = scmp.eq.s32.totalorder %s29, 7
      %p262 = por %p260, %p261
      %p264 = scmp.ne.s32.totalorder %s249, %s263
      %p265 = scmp.eq.s32.totalorder %s29, 0
      %p266 = por %p264, %p265
      %s267 = ssub.s32 %s23, %s30
      %p268 = scmp.eq.s32.totalorder %s267, 0
      %s270 = sadd.s32 %s269, 1
      %s271 = scalar_select %p268, %s269, %s270
      %p274 = pneg %p268
      %p275 = scmp.eq.s32.totalorder %s23, 7
      %p276 = por %p274, %p275
      %p277 = scmp.ne.s32.totalorder %s269, %s272
      %p278 = scmp.eq.s32.totalorder %s23, 0
      %p279 = por %p277, %p278
      %p280 = scmp.ne.s32.totalorder %s269, %s272
      %p281 = scmp.eq.s32.totalorder %s28, 7
      %p282 = por %p280, %p281
      %p283 = scmp.ne.s32.totalorder %s272, %s273
      %p284 = scmp.eq.s32.totalorder %s28, 0
      %p285 = por %p283, %p284
      %p286 = scmp.ne.s32.totalorder %s272, %s273
      %p287 = scmp.eq.s32.totalorder %s29, 7
      %p288 = por %p286, %p287
      %p290 = scmp.ne.s32.totalorder %s273, %s289
      %p291 = scmp.eq.s32.totalorder %s29, 0
      %p292 = por %p290, %p291
      %s293 = ssub.s32 %s23, %s30
      %p294 = scmp.eq.s32.totalorder %s293, 0
      %s296 = sadd.s32 %s295, 1
      %s297 = scalar_select %p294, %s295, %s296
      %p300 = pneg %p294
      %p301 = scmp.eq.s32.totalorder %s23, 7
      %p302 = por %p300, %p301
      %p303 = scmp.ne.s32.totalorder %s295, %s298
      %p304 = scmp.eq.s32.totalorder %s23, 0
      %p305 = por %p303, %p304
      %p306 = scmp.ne.s32.totalorder %s295, %s298
      %p307 = scmp.eq.s32.totalorder %s28, 7
      %p308 = por %p306, %p307
      %p309 = scmp.ne.s32.totalorder %s298, %s299
      %p310 = scmp.eq.s32.totalorder %s28, 0
      %p311 = por %p309, %p310
      %p312 = scmp.ne.s32.totalorder %s298, %s299
      %p313 = scmp.eq.s32.totalorder %s29, 7
      %p314 = por %p312, %p313
      %p316 = scmp.ne.s32.totalorder %s299, %s315
      %p317 = scmp.eq.s32.totalorder %s29, 0
      %p318 = por %p316, %p317
      %s319 = ssub.s32 %s23, %s30
      %p320 = scmp.eq.s32.totalorder %s319, 0
      %s322 = sadd.s32 %s321, 1
      %s323 = scalar_select %p320, %s321, %s322
      %p326 = pneg %p320
      %p327 = scmp.eq.s32.totalorder %s23, 7
      %p328 = por %p326, %p327
      %p329 = scmp.ne.s32.totalorder %s321, %s324
      %p330 = scmp.eq.s32.totalorder %s23, 0
      %p331 = por %p329, %p330
      %p332 = scmp.ne.s32.totalorder %s321, %s324
      %p333 = scmp.eq.s32.totalorder %s28, 7
      %p334 = por %p332, %p333
      %p335 = scmp.ne.s32.totalorder %s324, %s325
      %p336 = scmp.eq.s32.totalorder %s28, 0
      %p337 = por %p335, %p336
      %p338 = scmp.ne.s32.totalorder %s324, %s325
      %p339 = scmp.eq.s32.totalorder %s29, 7
      %p340 = por %p338, %p339
      %p342 = scmp.ne.s32.totalorder %s325, %s341
      %p343 = scmp.eq.s32.totalorder %s29, 0
      %p344 = por %p342, %p343
      %p345 = scmp.le.s32.totalorder 1, %s23
      %p346 = scmp.lt.s32.totalorder %s23, 9
      %p347 = pnand %p345, %p346
      %p348 = pneg %p347
      // Predicated region
      $region9: #{mean_autoencoder_forward.1} parent=5 // pred_check
        _
      $region10: #{mean_autoencoder_forward.1} parent=5 // pred_check_branch
        %350 = sbr.rel (%p347) target = $region12
      $region11: #{mean_autoencoder_forward.1} parent=5 // pred_region
        %s351 = ssub.s32 %s23, 1
        // Predicated region
        $region13: #{mean_autoencoder_forward.1} parent=11 // pred_check
          %p352 = pneg %p70
        $region14: #{mean_autoencoder_forward.1} parent=11 // pred_check_branch
          %354 = sbr.rel (%p352) target = $region16
        $region15: #{mean_autoencoder_forward.1} parent=11 // pred_region
          _
        $region16: #{mean_autoencoder_forward.1} parent=11 // pred_fallthru
          _
        // Predicated region
        $region17: #{mean_autoencoder_forward.1} parent=11 // pred_check
          %p355 = pneg %p91
        $region18: #{mean_autoencoder_forward.1} parent=11 // pred_check_branch
          %357 = sbr.rel (%p355) target = $region20
        $region19: #{mean_autoencoder_forward.1} parent=11 // pred_region
          _
        $region20: #{mean_autoencoder_forward.1} parent=11 // pred_fallthru
          _
        // Predicated region
        $region21: #{mean_autoencoder_forward.1} parent=11 // pred_check
          %p358 = pneg %p112
        $region22: #{mean_autoencoder_forward.1} parent=11 // pred_check_branch
          %360 = sbr.rel (%p358) target = $region24
        $region23: #{mean_autoencoder_forward.1} parent=11 // pred_region
          _
        $region24: #{mean_autoencoder_forward.1} parent=11 // pred_fallthru
          _
        // Predicated region
        $region25: #{mean_autoencoder_forward.1} parent=11 // pred_check
          %p361 = pneg %p133
        $region26: #{mean_autoencoder_forward.1} parent=11 // pred_check_branch
          %363 = sbr.rel (%p361) target = $region28
        $region27: #{mean_autoencoder_forward.1} parent=11 // pred_region
          _
        $region28: #{mean_autoencoder_forward.1} parent=11 // pred_fallthru
          _
        // Predicated region
        $region29: #{mean_autoencoder_forward.1} parent=11 // pred_check
          %p364 = pneg %p154
        $region30: #{mean_autoencoder_forward.1} parent=11 // pred_check_branch
          %366 = sbr.rel (%p364) target = $region32
        $region31: #{mean_autoencoder_forward.1} parent=11 // pred_region
          _
        $region32: #{mean_autoencoder_forward.1} parent=11 // pred_fallthru
          _
        // Predicated region
        $region33: #{mean_autoencoder_forward.1} parent=11 // pred_check
          %p367 = pneg %p175
        $region34: #{mean_autoencoder_forward.1} parent=11 // pred_check_branch
          %369 = sbr.rel (%p367) target = $region36
        $region35: #{mean_autoencoder_forward.1} parent=11 // pred_region
          _
        $region36: #{mean_autoencoder_forward.1} parent=11 // pred_fallthru
          _
        // Predicated region
        $region37: #{mean_autoencoder_forward.1} parent=11 // pred_check
          %p370 = pneg %p196
        $region38: #{mean_autoencoder_forward.1} parent=11 // pred_check_branch
          %372 = sbr.rel (%p370) target = $region40
        $region39: #{mean_autoencoder_forward.1} parent=11 // pred_region
          _
        $region40: #{mean_autoencoder_forward.1} parent=11 // pred_fallthru
          _
        // Predicated region
        $region41: #{mean_autoencoder_forward.1} parent=11 // pred_check
          %p373 = pneg %p217
        $region42: #{mean_autoencoder_forward.1} parent=11 // pred_check_branch
          %375 = sbr.rel (%p373) target = $region44
        $region43: #{mean_autoencoder_forward.1} parent=11 // pred_region
          _
        $region44: #{mean_autoencoder_forward.1} parent=11 // pred_fallthru
          _
        // Predicated region
        $region45: #{mean_autoencoder_forward.1} parent=11 // pred_check
          %p376 = pneg %p238
        $region46: #{mean_autoencoder_forward.1} parent=11 // pred_check_branch
          %378 = sbr.rel (%p376) target = $region48
        $region47: #{mean_autoencoder_forward.1} parent=11 // pred_region
          _
        $region48: #{mean_autoencoder_forward.1} parent=11 // pred_fallthru
          _
        // Predicated region
        $region49: #{mean_autoencoder_forward.1} parent=11 // pred_check
          %p379 = pneg %p259
        $region50: #{mean_autoencoder_forward.1} parent=11 // pred_check_branch
          %381 = sbr.rel (%p379) target = $region52
        $region51: #{mean_autoencoder_forward.1} parent=11 // pred_region
          _
        $region52: #{mean_autoencoder_forward.1} parent=11 // pred_fallthru
          _
      $region12: #{mean_autoencoder_forward.1} parent=5 // pred_fallthru
        _
      %p382 = scmp.lt.s32.totalorder %s23, 8
      // Predicated region
      $region53: #{mean_autoencoder_forward.1} parent=5 // pred_check
        %p383 = pneg %p382
      $region54: #{mean_autoencoder_forward.1} parent=5 // pred_check_branch
        %385 = sbr.rel (%p383) target = $region56
      $region55: #{mean_autoencoder_forward.1} parent=5 // pred_region
        // Predicated region
        $region57: #{mean_autoencoder_forward.1} parent=55 // pred_check
          %p386 = pneg %p43
        $region58: #{mean_autoencoder_forward.1} parent=55 // pred_check_branch
          %388 = sbr.rel (%p386) target = $region60
        $region59: #{mean_autoencoder_forward.1} parent=55 // pred_region
          %p389 = scmp.lt.s32.totalorder %s23, 7
          %s390 = scalar_select %p389, %s23, 7
          %s391 = smul.addr %s390, 2
          %s392 = smul.addr %s391, 8
          %s393 = scalar_lea.vmem %s0, %s392
        $region60: #{mean_autoencoder_forward.1} parent=55 // pred_fallthru
          _
      $region56: #{mean_autoencoder_forward.1} parent=5 // pred_fallthru
        _
      %p394 = scmp.le.s32.totalorder 1, %s23
      %p395 = scmp.lt.s32.totalorder %s23, 9
      %p396 = pnand %p394, %p395
      %p397 = pneg %p396
      // Predicated region
      $region61: #{mean_autoencoder_forward.1} parent=5 // pred_check
        _
      $region62: #{mean_autoencoder_forward.1} parent=5 // pred_check_branch
        %399 = sbr.rel (%p396) target = $region64
      $region63: #{mean_autoencoder_forward.1} parent=5 // pred_region
        %s400 = ssub.s32 %s23, 1
        %p401 = scmp.lt.s32.totalorder %s28, 7
        %s402 = scalar_select %p401, %s28, 7
        %s403 = smul.addr %s402, 2
        %s404 = smul.addr %s403, 8
        %s405 = scalar_lea.vmem %s0, %s404
        %p406 = pneg %p49
        %p407 = pneg %p46
        %p408 = pneg %p70
        %p409 = pneg %p67
        %p410 = pneg %p91
        %p411 = pneg %p88
        %p412 = pneg %p112
        %p413 = pneg %p109
        %p414 = pneg %p133
        %p415 = pneg %p130
        %p416 = pneg %p154
        %p417 = pneg %p151
        %p418 = pneg %p175
        %p419 = pneg %p172
        %p420 = pneg %p196
        %p421 = pneg %p193
        %p422 = pneg %p217
        %p423 = pneg %p214
        %p424 = pneg %p238
        %p425 = pneg %p235
        %p426 = pneg %p259
        %p427 = pneg %p256
        %p428 = pneg %p285
        %p429 = pneg %p282
        %s430 = sand.u32 %s272, 1
        %s431 = scalar_lea.sflag [#allocation3], %s430
        %s432 = sand.u32 %s272, 1
        %s433 = scalar_lea.vmem [#allocation2], %s432
        %p434 = pneg %p311
        %p435 = pneg %p308
        %p436 = scmp.lt.s32.totalorder %s28, 7
        %s437 = scalar_select %p436, %s28, 7
        %s438 = smul.addr %s437, 2
        %s439 = smul.addr %s438, 8
        %s440 = scalar_lea.vmem %s12, %s439
        %p441 = pneg %p337
        %p442 = pneg %p334
        %p443 = scmp.lt.s32.totalorder %s28, 7
        %s444 = scalar_select %p443, %s28, 7
        %s445 = scalar_lea.vmem %s13, %s444
        %p446 = scmp.lt.s32.totalorder %s28, 7
        %s447 = scalar_select %p446, %s28, 7
        %s448 = smul.addr %s447, 2
        %s449 = smul.addr %s448, 8
        %s450 = scalar_lea.vmem %s0, %s449
        %p451 = scmp.lt.s32.totalorder %s28, 7
        %s452 = scalar_select %p451, %s28, 7
        %s453 = smul.addr %s452, 2
        %s454 = smul.addr %s453, 8
        %s455 = scalar_lea.vmem %s12, %s454
        %p456 = scmp.lt.s32.totalorder %s28, 7
        %s457 = scalar_select %p456, %s28, 7
        %s458 = scalar_lea.vmem %s13, %s457
        %v460 = vld [vmem:[%s450] sm:$0xff]
        %v461 = vld [vmem:[%s450 + $0x8] sm:$0xff]
        %v462 = vpack.c.bf16 %v461, %v460
        %v463 = vld [vmem:[%s1] sm:$0xf]
        %v464 = vld [vmem:[%s1 + $0x4] sm:$0xf]
        %v465 = vld [vmem:[%s1 + $0x8] sm:$0xf]
        %v466 = vld [vmem:[%s1 + $0xc] sm:$0xf]
        %v467 = vld [vmem:[%s1 + $0x10] sm:$0xf]
        %v468 = vld [vmem:[%s1 + $0x14] sm:$0xf]
        %v469 = vld [vmem:[%s1 + $0x18] sm:$0xf]
        %v470 = vld [vmem:[%s1 + $0x1c] sm:$0xf]
        %v471 = vld [vmem:[%s1 + $0x20] sm:$0xf]
        %v472 = vld [vmem:[%s1 + $0x24] sm:$0xf]
        %v473 = vld [vmem:[%s1 + $0x28] sm:$0xf]
        %v474 = vld [vmem:[%s1 + $0x2c] sm:$0xf]
        %v475 = vld [vmem:[%s1 + $0x30] sm:$0xf]
        %v476 = vld [vmem:[%s1 + $0x34] sm:$0xf]
        %v477 = vld [vmem:[%s1 + $0x38] sm:$0xf]
        %v478 = vld [vmem:[%s1 + $0x3c] sm:$0xf]
        %v479 = vld [vmem:[%s2] sm:$0x1]
        %v481 = vlaneseq
        %v482 = vshrl.u32 %v481, 7
        %v483 = vsub.s32 0, %v482
        %v484 = vrot.slane %v479, %v483
        %v502 = vunpack.c.l.b16 %v463
        %v503 = vunpack.c.l.b16 %v464
        %v504 = vunpack.c.l.b16 %v465
        %v505 = vunpack.c.l.b16 %v466
        %v506 = vunpack.c.l.b16 %v467
        %v507 = vunpack.c.l.b16 %v468
        %v508 = vunpack.c.l.b16 %v469
        %v509 = vunpack.c.l.b16 %v470
        %v510 = vunpack.c.l.b16 %v471
        %v511 = vunpack.c.l.b16 %v472
        %v512 = vunpack.c.l.b16 %v473
        %v513 = vunpack.c.l.b16 %v474
        %v514 = vunpack.c.l.b16 %v475
        %v515 = vunpack.c.l.b16 %v476
        %v516 = vunpack.c.l.b16 %v477
        %v517 = vunpack.c.l.b16 %v478
        %v518 = vpack.c.b16 %v503, %v502
        %v519 = vpack.c.b16 %v505, %v504
        %v520 = vpack.c.b16 %v507, %v506
        %v521 = vpack.c.b16 %v509, %v508
        %v522 = vpack.c.b16 %v511, %v510
        %v523 = vpack.c.b16 %v513, %v512
        %v524 = vpack.c.b16 %v515, %v514
        %v525 = vpack.c.b16 %v517, %v516
        %534 = vmatprep.subr.bf16.mxu0 0
        %535 = vmatpush1.bf16.msra.mxu0 %v518
        %536 = vmatprep.subr.bf16.mxu0 0
        %537 = vmatpush1.bf16.msra.mxu0 %v519
        %538 = vmatprep.subr.bf16.mxu0 0
        %539 = vmatpush1.bf16.msra.mxu0 %v520
        %540 = vmatprep.subr.bf16.mxu0 0
        %541 = vmatpush1.bf16.msra.mxu0 %v521
        %542 = vmatprep.subr.bf16.mxu0 0
        %543 = vmatpush1.bf16.msra.mxu0 %v522
        %544 = vmatprep.subr.bf16.mxu0 0
        %545 = vmatpush1.bf16.msra.mxu0 %v523
        %546 = vmatprep.subr.bf16.mxu0 0
        %547 = vmatpush1.bf16.msra.mxu0 %v524
        %548 = vmatprep.subr.bf16.mxu0 0
        %549 = vmatpush1.bf16.msra.mxu0 %v525
        %550 = vmatprep.subr.bf16.mxu0 0
        %551 = vmatpush1.bf16.msra.mxu0 0
        %552 = vmatprep.subr.bf16.mxu0 0
        %553 = vmatpush1.bf16.msra.mxu0 0
        %554 = vmatprep.subr.bf16.mxu0 0
        %555 = vmatpush1.bf16.msra.mxu0 0
        %556 = vmatprep.subr.bf16.mxu0 0
        %557 = vmatpush1.bf16.msra.mxu0 0
        %558 = vmatprep.subr.bf16.mxu0 0
        %559 = vmatpush1.bf16.msra.mxu0 0
        %560 = vmatprep.subr.bf16.mxu0 0
        %561 = vmatpush1.bf16.msra.mxu0 0
        %562 = vmatprep.subr.bf16.mxu0 0
        %563 = vmatpush1.bf16.msra.mxu0 0
        %564 = vmatprep.subr.bf16.mxu0 0
        %565 = vmatpush1.bf16.msra.mxu0 0
        %566 = vmatprep.mubr.bf16.mxu0 0
        %567 = vmatmul.mubr.bf16.gmra.mrb[0].mxu0 %v462
        %v568 = vpop.f32.mrb[0].mxu0
        %v569 = vadd.f32 %v484, %v568
        %v570 = vpop.f32.mrb[0].mxu0
        %v571 = vpop.f32.mrb[0].mxu0
        %v572 = vadd.f32 %v484, %v571
        %v573 = vpop.f32.mrb[0].mxu0
        %574 = vdwg.mxu0
        %v575 = vmax.f32 %v569, 0.0
        %v576 = vmax.f32 %v572, 0.0
        %v577 = vpack.c.bf16 %v576, %v575
        %v578 = vld [vmem:[%s3] sm:$0xf]
        %v579 = vld [vmem:[%s3 + $0x4] sm:$0xf]
        %v580 = vld [vmem:[%s3 + $0x8] sm:$0xf]
        %v581 = vld [vmem:[%s3 + $0xc] sm:$0xf]
        %v582 = vld [vmem:[%s3 + $0x10] sm:$0xf]
        %v583 = vld [vmem:[%s3 + $0x14] sm:$0xf]
        %v584 = vld [vmem:[%s3 + $0x18] sm:$0xf]
        %v585 = vld [vmem:[%s3 + $0x1c] sm:$0xf]
        %v586 = vld [vmem:[%s3 + $0x20] sm:$0xf]
        %v587 = vld [vmem:[%s3 + $0x24] sm:$0xf]
        %v588 = vld [vmem:[%s3 + $0x28] sm:$0xf]
        %v589 = vld [vmem:[%s3 + $0x2c] sm:$0xf]
        %v590 = vld [vmem:[%s3 + $0x30] sm:$0xf]
        %v591 = vld [vmem:[%s3 + $0x34] sm:$0xf]
        %v592 = vld [vmem:[%s3 + $0x38] sm:$0xf]
        %v593 = vld [vmem:[%s3 + $0x3c] sm:$0xf]
        %v594 = vld [vmem:[%s4] sm:$0x1]
        %v596 = vlaneseq
        %v597 = vshrl.u32 %v596, 7
        %v598 = vsub.s32 0, %v597
        %v599 = vrot.slane %v594, %v598
        %v617 = vunpack.c.l.b16 %v578
        %v618 = vunpack.c.l.b16 %v579
        %v619 = vunpack.c.l.b16 %v580
        %v620 = vunpack.c.l.b16 %v581
        %v621 = vunpack.c.l.b16 %v582
        %v622 = vunpack.c.l.b16 %v583
        %v623 = vunpack.c.l.b16 %v584
        %v624 = vunpack.c.l.b16 %v585
        %v625 = vunpack.c.l.b16 %v586
        %v626 = vunpack.c.l.b16 %v587
        %v627 = vunpack.c.l.b16 %v588
        %v628 = vunpack.c.l.b16 %v589
        %v629 = vunpack.c.l.b16 %v590
        %v630 = vunpack.c.l.b16 %v591
        %v631 = vunpack.c.l.b16 %v592
        %v632 = vunpack.c.l.b16 %v593
        %v633 = vpack.c.b16 %v618, %v617
        %v634 = vpack.c.b16 %v620, %v619
        %v635 = vpack.c.b16 %v622, %v621
        %v636 = vpack.c.b16 %v624, %v623
        %v637 = vpack.c.b16 %v626, %v625
        %v638 = vpack.c.b16 %v628, %v627
        %v639 = vpack.c.b16 %v630, %v629
        %v640 = vpack.c.b16 %v632, %v631
        %649 = vmatprep.subr.bf16.mxu0 0
        %650 = vmatpush1.bf16.msra.mxu0 %v633
        %651 = vmatprep.subr.bf16.mxu0 0
        %652 = vmatpush1.bf16.msra.mxu0 %v634
        %653 = vmatprep.subr.bf16.mxu0 0
        %654 = vmatpush1.bf16.msra.mxu0 %v635
        %655 = vmatprep.subr.bf16.mxu0 0
        %656 = vmatpush1.bf16.msra.mxu0 %v636
        %657 = vmatprep.subr.bf16.mxu0 0
        %658 = vmatpush1.bf16.msra.mxu0 %v637
        %659 = vmatprep.subr.bf16.mxu0 0
        %660 = vmatpush1.bf16.msra.mxu0 %v638
        %661 = vmatprep.subr.bf16.mxu0 0
        %662 = vmatpush1.bf16.msra.mxu0 %v639
        %663 = vmatprep.subr.bf16.mxu0 0
        %664 = vmatpush1.bf16.msra.mxu0 %v640
        %665 = vmatprep.subr.bf16.mxu0 0
        %666 = vmatpush1.bf16.msra.mxu0 0
        %667 = vmatprep.subr.bf16.mxu0 0
        %668 = vmatpush1.bf16.msra.mxu0 0
        %669 = vmatprep.subr.bf16.mxu0 0
        %670 = vmatpush1.bf16.msra.mxu0 0
        %671 = vmatprep.subr.bf16.mxu0 0
        %672 = vmatpush1.bf16.msra.mxu0 0
        %673 = vmatprep.subr.bf16.mxu0 0
        %674 = vmatpush1.bf16.msra.mxu0 0
        %675 = vmatprep.subr.bf16.mxu0 0
        %676 = vmatpush1.bf16.msra.mxu0 0
        %677 = vmatprep.subr.bf16.mxu0 0
        %678 = vmatpush1.bf16.msra.mxu0 0
        %679 = vmatprep.subr.bf16.mxu0 0
        %680 = vmatpush1.bf16.msra.mxu0 0
        %681 = vmatprep.mubr.bf16.mxu0 0
        %682 = vmatmul.mubr.bf16.gmra.mrb[0].mxu0 %v577
        %v683 = vpop.f32.mrb[0].mxu0
        %v684 = vadd.f32 %v599, %v683
        %v685 = vpop.f32.mrb[0].mxu0
        %v686 = vpop.f32.mrb[0].mxu0
        %v687 = vadd.f32 %v599, %v686
        %v688 = vpop.f32.mrb[0].mxu0
        %689 = vdwg.mxu0
        %v690 = vmax.f32 %v684, 0.0
        %v691 = vmax.f32 %v687, 0.0
        %v692 = vpack.c.bf16 %v691, %v690
        %v693 = vld [vmem:[%s5] sm:$0xf]
        %v694 = vld [vmem:[%s5 + $0x4] sm:$0xf]
        %v695 = vld [vmem:[%s5 + $0x8] sm:$0xf]
        %v696 = vld [vmem:[%s5 + $0xc] sm:$0xf]
        %v697 = vld [vmem:[%s5 + $0x10] sm:$0xf]
        %v698 = vld [vmem:[%s5 + $0x14] sm:$0xf]
        %v699 = vld [vmem:[%s5 + $0x18] sm:$0xf]
        %v700 = vld [vmem:[%s5 + $0x1c] sm:$0xf]
        %v701 = vld [vmem:[%s5 + $0x20] sm:$0xf]
        %v702 = vld [vmem:[%s5 + $0x24] sm:$0xf]
        %v703 = vld [vmem:[%s5 + $0x28] sm:$0xf]
        %v704 = vld [vmem:[%s5 + $0x2c] sm:$0xf]
        %v705 = vld [vmem:[%s5 + $0x30] sm:$0xf]
        %v706 = vld [vmem:[%s5 + $0x34] sm:$0xf]
        %v707 = vld [vmem:[%s5 + $0x38] sm:$0xf]
        %v708 = vld [vmem:[%s5 + $0x3c] sm:$0xf]
        %v709 = vld [vmem:[%s6] sm:$0x1]
        %v711 = vlaneseq
        %v712 = vshrl.u32 %v711, 7
        %v713 = vsub.s32 0, %v712
        %v714 = vrot.slane %v709, %v713
        %v732 = vunpack.c.l.b16 %v693
        %v733 = vunpack.c.l.b16 %v694
        %v734 = vunpack.c.l.b16 %v695
        %v735 = vunpack.c.l.b16 %v696
        %v736 = vunpack.c.l.b16 %v697
        %v737 = vunpack.c.l.b16 %v698
        %v738 = vunpack.c.l.b16 %v699
        %v739 = vunpack.c.l.b16 %v700
        %v740 = vunpack.c.l.b16 %v701
        %v741 = vunpack.c.l.b16 %v702
        %v742 = vunpack.c.l.b16 %v703
        %v743 = vunpack.c.l.b16 %v704
        %v744 = vunpack.c.l.b16 %v705
        %v745 = vunpack.c.l.b16 %v706
        %v746 = vunpack.c.l.b16 %v707
        %v747 = vunpack.c.l.b16 %v708
        %v748 = vpack.c.b16 %v733, %v732
        %v749 = vpack.c.b16 %v735, %v734
        %v750 = vpack.c.b16 %v737, %v736
        %v751 = vpack.c.b16 %v739, %v738
        %v752 = vpack.c.b16 %v741, %v740
        %v753 = vpack.c.b16 %v743, %v742
        %v754 = vpack.c.b16 %v745, %v744
        %v755 = vpack.c.b16 %v747, %v746
        %764 = vmatprep.subr.bf16.mxu0 0
        %765 = vmatpush1.bf16.msra.mxu0 %v748
        %766 = vmatprep.subr.bf16.mxu0 0
        %767 = vmatpush1.bf16.msra.mxu0 %v749
        %768 = vmatprep.subr.bf16.mxu0 0
        %769 = vmatpush1.bf16.msra.mxu0 %v750
        %770 = vmatprep.subr.bf16.mxu0 0
        %771 = vmatpush1.bf16.msra.mxu0 %v751
        %772 = vmatprep.subr.bf16.mxu0 0
        %773 = vmatpush1.bf16.msra.mxu0 %v752
        %774 = vmatprep.subr.bf16.mxu0 0
        %775 = vmatpush1.bf16.msra.mxu0 %v753
        %776 = vmatprep.subr.bf16.mxu0 0
        %777 = vmatpush1.bf16.msra.mxu0 %v754
        %778 = vmatprep.subr.bf16.mxu0 0
        %779 = vmatpush1.bf16.msra.mxu0 %v755
        %780 = vmatprep.subr.bf16.mxu0 0
        %781 = vmatpush1.bf16.msra.mxu0 0
        %782 = vmatprep.subr.bf16.mxu0 0
        %783 = vmatpush1.bf16.msra.mxu0 0
        %784 = vmatprep.subr.bf16.mxu0 0
        %785 = vmatpush1.bf16.msra.mxu0 0
        %786 = vmatprep.subr.bf16.mxu0 0
        %787 = vmatpush1.bf16.msra.mxu0 0
        %788 = vmatprep.subr.bf16.mxu0 0
        %789 = vmatpush1.bf16.msra.mxu0 0
        %790 = vmatprep.subr.bf16.mxu0 0
        %791 = vmatpush1.bf16.msra.mxu0 0
        %792 = vmatprep.subr.bf16.mxu0 0
        %793 = vmatpush1.bf16.msra.mxu0 0
        %794 = vmatprep.subr.bf16.mxu0 0
        %795 = vmatpush1.bf16.msra.mxu0 0
        %796 = vmatprep.mubr.bf16.mxu0 0
        %797 = vmatmul.mubr.bf16.gmra.mrb[0].mxu0 %v692
        %v798 = vpop.f32.mrb[0].mxu0
        %v799 = vadd.f32 %v714, %v798
        %v800 = vpop.f32.mrb[0].mxu0
        %v801 = vpop.f32.mrb[0].mxu0
        %v802 = vadd.f32 %v714, %v801
        %v803 = vpop.f32.mrb[0].mxu0
        %804 = vdwg.mxu0
        %v805 = vmax.f32 %v799, 0.0
        %v806 = vmax.f32 %v802, 0.0
        %v807 = vpack.c.bf16 %v806, %v805
        %v808 = vld [vmem:[%s7] sm:$0xf]
        %v809 = vld [vmem:[%s7 + $0x4] sm:$0xf]
        %v810 = vld [vmem:[%s7 + $0x8] sm:$0xf]
        %v811 = vld [vmem:[%s7 + $0xc] sm:$0xf]
        %v812 = vld [vmem:[%s7 + $0x10] sm:$0xf]
        %v813 = vld [vmem:[%s7 + $0x14] sm:$0xf]
        %v814 = vld [vmem:[%s7 + $0x18] sm:$0xf]
        %v815 = vld [vmem:[%s7 + $0x1c] sm:$0xf]
        %v816 = vld [vmem:[%s7 + $0x20] sm:$0xf]
        %v817 = vld [vmem:[%s7 + $0x24] sm:$0xf]
        %v818 = vld [vmem:[%s7 + $0x28] sm:$0xf]
        %v819 = vld [vmem:[%s7 + $0x2c] sm:$0xf]
        %v820 = vld [vmem:[%s7 + $0x30] sm:$0xf]
        %v821 = vld [vmem:[%s7 + $0x34] sm:$0xf]
        %v822 = vld [vmem:[%s7 + $0x38] sm:$0xf]
        %v823 = vld [vmem:[%s7 + $0x3c] sm:$0xf]
        %v824 = vld [vmem:[%s8] sm:$0x1]
        %v826 = vlaneseq
        %v827 = vshrl.u32 %v826, 7
        %v828 = vsub.s32 0, %v827
        %v829 = vrot.slane %v824, %v828
        %v847 = vunpack.c.l.b16 %v808
        %v848 = vunpack.c.l.b16 %v809
        %v849 = vunpack.c.l.b16 %v810
        %v850 = vunpack.c.l.b16 %v811
        %v851 = vunpack.c.l.b16 %v812
        %v852 = vunpack.c.l.b16 %v813
        %v853 = vunpack.c.l.b16 %v814
        %v854 = vunpack.c.l.b16 %v815
        %v855 = vunpack.c.l.b16 %v816
        %v856 = vunpack.c.l.b16 %v817
        %v857 = vunpack.c.l.b16 %v818
        %v858 = vunpack.c.l.b16 %v819
        %v859 = vunpack.c.l.b16 %v820
        %v860 = vunpack.c.l.b16 %v821
        %v861 = vunpack.c.l.b16 %v822
        %v862 = vunpack.c.l.b16 %v823
        %v863 = vpack.c.b16 %v848, %v847
        %v864 = vpack.c.b16 %v850, %v849
        %v865 = vpack.c.b16 %v852, %v851
        %v866 = vpack.c.b16 %v854, %v853
        %v867 = vpack.c.b16 %v856, %v855
        %v868 = vpack.c.b16 %v858, %v857
        %v869 = vpack.c.b16 %v860, %v859
        %v870 = vpack.c.b16 %v862, %v861
        %879 = vmatprep.subr.bf16.mxu0 0
        %880 = vmatpush1.bf16.msra.mxu0 %v863
        %881 = vmatprep.subr.bf16.mxu0 0
        %882 = vmatpush1.bf16.msra.mxu0 %v864
        %883 = vmatprep.subr.bf16.mxu0 0
        %884 = vmatpush1.bf16.msra.mxu0 %v865
        %885 = vmatprep.subr.bf16.mxu0 0
        %886 = vmatpush1.bf16.msra.mxu0 %v866
        %887 = vmatprep.subr.bf16.mxu0 0
        %888 = vmatpush1.bf16.msra.mxu0 %v867
        %889 = vmatprep.subr.bf16.mxu0 0
        %890 = vmatpush1.bf16.msra.mxu0 %v868
        %891 = vmatprep.subr.bf16.mxu0 0
        %892 = vmatpush1.bf16.msra.mxu0 %v869
        %893 = vmatprep.subr.bf16.mxu0 0
        %894 = vmatpush1.bf16.msra.mxu0 %v870
        %895 = vmatprep.subr.bf16.mxu0 0
        %896 = vmatpush1.bf16.msra.mxu0 0
        %897 = vmatprep.subr.bf16.mxu0 0
        %898 = vmatpush1.bf16.msra.mxu0 0
        %899 = vmatprep.subr.bf16.mxu0 0
        %900 = vmatpush1.bf16.msra.mxu0 0
        %901 = vmatprep.subr.bf16.mxu0 0
        %902 = vmatpush1.bf16.msra.mxu0 0
        %903 = vmatprep.subr.bf16.mxu0 0
        %904 = vmatpush1.bf16.msra.mxu0 0
        %905 = vmatprep.subr.bf16.mxu0 0
        %906 = vmatpush1.bf16.msra.mxu0 0
        %907 = vmatprep.subr.bf16.mxu0 0
        %908 = vmatpush1.bf16.msra.mxu0 0
        %909 = vmatprep.subr.bf16.mxu0 0
        %910 = vmatpush1.bf16.msra.mxu0 0
        %911 = vmatprep.mubr.bf16.mxu0 0
        %912 = vmatmul.mubr.bf16.gmra.mrb[0].mxu0 %v807
        %v913 = vpop.f32.mrb[0].mxu0
        %v914 = vadd.f32 %v829, %v913
        %v915 = vpop.f32.mrb[0].mxu0
        %v916 = vpop.f32.mrb[0].mxu0
        %v917 = vadd.f32 %v829, %v916
        %v918 = vpop.f32.mrb[0].mxu0
        %919 = vdwg.mxu0
        %v920 = vlaneseq
        %v921 = vshrl.u32 %v920, 7
        %v922 = vadd.s32 %v921, 8
        %vm923 = vcmp.lt.s32.totalorder %v921, 10
        %vm924 = vcmp.lt.s32.totalorder %v922, 10
        %v925 = vsel %vm923, 1, 0
        %v926 = vsel %vm924, 1, 0
        %v927 = vcvt.s32.f32 %v925
        %v928 = vcvt.s32.f32 %v926
        %v929 = vsub.f32 %v460, %v914
        %v930 = vsub.f32 %v461, %v917
        %v931 = vmul.f32 %v929, %v927
        %v932 = vmul.f32 %v930, %v928
        %v933 = vmul.f32 %v931, %v931
        %v934 = vmul.f32 %v932, %v932
        %v935 = vadd.f32 %v933, %v934
        %936 = vadd.xlane.f32.xlu0 %v935
        %v937 = vpop.xlane.xlu0 %936
        %v938 = vrot.slane %v937, 4
        %v939 = vadd.f32 %v937, %v938
        %v940 = vrot.slane %v939, 2
        %v941 = vadd.f32 %v939, %v940
        %v942 = vrot.slane %v941, 1
        %v943 = vadd.f32 %v941, %v942
        %s944 = vtos %v943
        %s945 = smul.f32 %s944, 0.0007246377
        %v946 = vstv %s945
        %947 = vst [vmem:[%s458] sm:$0x1] %v946
        %v948 = vld [vmem:[%s9] sm:$0xf]
        %v949 = vld [vmem:[%s9 + $0x4] sm:$0xf]
        %v950 = vld [vmem:[%s9 + $0x8] sm:$0xf]
        %v951 = vld [vmem:[%s9 + $0xc] sm:$0xf]
        %v952 = vld [vmem:[%s9 + $0x10] sm:$0xf]
        %v953 = vld [vmem:[%s9 + $0x14] sm:$0xf]
        %v954 = vld [vmem:[%s9 + $0x18] sm:$0xf]
        %v955 = vld [vmem:[%s9 + $0x1c] sm:$0xf]
        %v956 = vld [vmem:[%s9 + $0x20] sm:$0xf]
        %v957 = vld [vmem:[%s9 + $0x24] sm:$0xf]
        %v958 = vld [vmem:[%s9 + $0x28] sm:$0xf]
        %v959 = vld [vmem:[%s9 + $0x2c] sm:$0xf]
        %v960 = vld [vmem:[%s9 + $0x30] sm:$0xf]
        %v961 = vld [vmem:[%s9 + $0x34] sm:$0xf]
        %v962 = vld [vmem:[%s9 + $0x38] sm:$0xf]
        %v963 = vld [vmem:[%s9 + $0x3c] sm:$0xf]
        %v964 = vld [vmem:[%s10] sm:$0x1]
        %v966 = vlaneseq
        %v967 = vshrl.u32 %v966, 7
        %v968 = vsub.s32 0, %v967
        %v969 = vrot.slane %v964, %v968
        %v987 = vunpack.c.l.b16 %v948
        %v988 = vunpack.c.l.b16 %v949
        %v989 = vunpack.c.l.b16 %v950
        %v990 = vunpack.c.l.b16 %v951
        %v991 = vunpack.c.l.b16 %v952
        %v992 = vunpack.c.l.b16 %v953
        %v993 = vunpack.c.l.b16 %v954
        %v994 = vunpack.c.l.b16 %v955
        %v995 = vunpack.c.l.b16 %v956
        %v996 = vunpack.c.l.b16 %v957
        %v997 = vunpack.c.l.b16 %v958
        %v998 = vunpack.c.l.b16 %v959
        %v999 = vunpack.c.l.b16 %v960
        %v1000 = vunpack.c.l.b16 %v961
        %v1001 = vunpack.c.l.b16 %v962
        %v1002 = vunpack.c.l.b16 %v963
        %v1003 = vpack.c.b16 %v988, %v987
        %v1004 = vpack.c.b16 %v990, %v989
        %v1005 = vpack.c.b16 %v992, %v991
        %v1006 = vpack.c.b16 %v994, %v993
        %v1007 = vpack.c.b16 %v996, %v995
        %v1008 = vpack.c.b16 %v998, %v997
        %v1009 = vpack.c.b16 %v1000, %v999
        %v1010 = vpack.c.b16 %v1002, %v1001
        %1019 = vmatprep.subr.bf16.mxu0 0
        %1020 = vmatpush1.bf16.msra.mxu0 %v1003
        %1021 = vmatprep.subr.bf16.mxu0 0
        %1022 = vmatpush1.bf16.msra.mxu0 %v1004
        %1023 = vmatprep.subr.bf16.mxu0 0
        %1024 = vmatpush1.bf16.msra.mxu0 %v1005
        %1025 = vmatprep.subr.bf16.mxu0 0
        %1026 = vmatpush1.bf16.msra.mxu0 %v1006
        %1027 = vmatprep.subr.bf16.mxu0 0
        %1028 = vmatpush1.bf16.msra.mxu0 %v1007
        %1029 = vmatprep.subr.bf16.mxu0 0
        %1030 = vmatpush1.bf16.msra.mxu0 %v1008
        %1031 = vmatprep.subr.bf16.mxu0 0
        %1032 = vmatpush1.bf16.msra.mxu0 %v1009
        %1033 = vmatprep.subr.bf16.mxu0 0
        %1034 = vmatpush1.bf16.msra.mxu0 %v1010
        %1035 = vmatprep.subr.bf16.mxu0 0
        %1036 = vmatpush1.bf16.msra.mxu0 0
        %1037 = vmatprep.subr.bf16.mxu0 0
        %1038 = vmatpush1.bf16.msra.mxu0 0
        %1039 = vmatprep.subr.bf16.mxu0 0
        %1040 = vmatpush1.bf16.msra.mxu0 0
        %1041 = vmatprep.subr.bf16.mxu0 0
        %1042 = vmatpush1.bf16.msra.mxu0 0
        %1043 = vmatprep.subr.bf16.mxu0 0
        %1044 = vmatpush1.bf16.msra.mxu0 0
        %1045 = vmatprep.subr.bf16.mxu0 0
        %1046 = vmatpush1.bf16.msra.mxu0 0
        %1047 = vmatprep.subr.bf16.mxu0 0
        %1048 = vmatpush1.bf16.msra.mxu0 0
        %1049 = vmatprep.subr.bf16.mxu0 0
        %1050 = vmatpush1.bf16.msra.mxu0 0
        %1051 = vmatprep.mubr.bf16.mxu0 0
        %1052 = vmatmul.mubr.bf16.gmra.mrb[0].mxu0 %v692
        %v1053 = vpop.f32.mrb[0].mxu0
        %v1054 = vadd.f32 %v969, %v1053
        %v1055 = vpop.f32.mrb[0].mxu0
        %v1056 = vpop.f32.mrb[0].mxu0
        %v1057 = vadd.f32 %v969, %v1056
        %v1058 = vpop.f32.mrb[0].mxu0
        %1059 = vdwg.mxu0
        %v1060 = vmax.f32 %v1054, 0.0
        %v1061 = vmax.f32 %v1057, 0.0
        %v1062 = vmul.f32 %v1060, %v927
        %v1063 = vmul.f32 %v1061, %v928
        %1064 = vst [vmem:[%s455] sm:$0xff] %v1062
        %1065 = vst [vmem:[%s455 + $0x8] sm:$0xff] %v1063
        %v1066 = vadd.f32 %v1062, %v1063
        %v1067 = vrot.slane %v1066, 4
        %v1068 = vadd.f32 %v1066, %v1067
        %v1069 = vrot.slane %v1068, 2
        %v1070 = vadd.f32 %v1068, %v1069
        %v1071 = vrot.slane %v1070, 1
        %v1072 = vadd.f32 %v1070, %v1071
        %v1073 = vmul.f32 %v1072, 0.1
        %1074 = vst [vmem:[%s433] sm:$0x1] %v1073
        %s1075 = sand.u32 %s272, 1
        %s1076 = scalar_lea.sflag [#allocation3], %s1075
        %s1077 = sand.u32 %s272, 1
        %s1078 = scalar_lea.vmem [#allocation2], %s1077
        %p1079 = scmp.lt.s32.totalorder %s28, 7
        %s1080 = scalar_select %p1079, %s28, 7
        %s1081 = smul.addr %s1080, 2
        %s1082 = smul.addr %s1081, 8
        %s1083 = scalar_lea.vmem %s12, %s1082
        %p1084 = scmp.lt.s32.totalorder %s28, 7
        %s1085 = scalar_select %p1084, %s28, 7
        %s1086 = scalar_lea.vmem %s13, %s1085
        // Predicated region
        $region65: #{mean_autoencoder_forward.1} parent=63 // pred_check
          %p1087 = pneg %p282
        $region66: #{mean_autoencoder_forward.1} parent=63 // pred_check_branch
          %1089 = sbr.rel (%p1087) target = $region68
        $region67: #{mean_autoencoder_forward.1} parent=63 // pred_region
          %s1091 = ssub.s32 16, 16
          %1092 = vsyncadd %s1076, %s1091
          %s1093 = smul.addr %s28, 16
          %s1094 = scalar_lea.hbm %s11, %s1093
          %s1096 = sshll.u32 %s1078, 4
          %s1097 = int_to_ptr.vmem [resolvable:$true] %s1096
          %1099 = dma.vmem_to_hbm [thread:$0]  %s1097, 16, %s1094, %s1076
        $region68: #{mean_autoencoder_forward.1} parent=63 // pred_fallthru
          _
        // Predicated region
        $region69: #{mean_autoencoder_forward.1} parent=63 // pred_check
          %p1100 = pneg %p308
        $region70: #{mean_autoencoder_forward.1} parent=63 // pred_check_branch
          %1102 = sbr.rel (%p1100) target = $region72
        $region71: #{mean_autoencoder_forward.1} parent=63 // pred_region
          _
        $region72: #{mean_autoencoder_forward.1} parent=63 // pred_fallthru
          _
        // Predicated region
        $region73: #{mean_autoencoder_forward.1} parent=63 // pred_check
          %p1103 = pneg %p334
        $region74: #{mean_autoencoder_forward.1} parent=63 // pred_check_branch
          %1105 = sbr.rel (%p1103) target = $region76
        $region75: #{mean_autoencoder_forward.1} parent=63 // pred_region
          _
        $region76: #{mean_autoencoder_forward.1} parent=63 // pred_fallthru
          _
      $region64: #{mean_autoencoder_forward.1} parent=5 // pred_fallthru
        _
      %p1106 = scmp.le.s32.totalorder 2, %s23
      // Predicated region
      $region77: #{mean_autoencoder_forward.1} parent=5 // pred_check
        %p1107 = pneg %p1106
      $region78: #{mean_autoencoder_forward.1} parent=5 // pred_check_branch
        %1109 = sbr.rel (%p1107) target = $region80
      $region79: #{mean_autoencoder_forward.1} parent=5 // pred_region
        %s1110 = ssub.s32 %s23, 2
        // Predicated region
        $region81: #{mean_autoencoder_forward.1} parent=79 // pred_check
          %p1111 = pneg %p288
        $region82: #{mean_autoencoder_forward.1} parent=79 // pred_check_branch
          %1113 = sbr.rel (%p1111) target = $region84
        $region83: #{mean_autoencoder_forward.1} parent=79 // pred_region
          %s1114 = sand.u32 %s273, 1
          %s1115 = scalar_lea.sflag [#allocation3], %s1114
          %s1116 = sand.u32 %s273, 1
          %s1117 = scalar_lea.vmem [#allocation2], %s1116
          %1118 = dma.done %s1115, 16
        $region84: #{mean_autoencoder_forward.1} parent=79 // pred_fallthru
          _
        // Predicated region
        $region85: #{mean_autoencoder_forward.1} parent=79 // pred_check
          %p1119 = pneg %p314
        $region86: #{mean_autoencoder_forward.1} parent=79 // pred_check_branch
          %1121 = sbr.rel (%p1119) target = $region88
        $region87: #{mean_autoencoder_forward.1} parent=79 // pred_region
          %p1122 = scmp.lt.s32.totalorder %s29, 7
          %s1123 = scalar_select %p1122, %s29, 7
          %s1124 = smul.addr %s1123, 2
          %s1125 = smul.addr %s1124, 8
          %s1126 = scalar_lea.vmem %s12, %s1125
        $region88: #{mean_autoencoder_forward.1} parent=79 // pred_fallthru
          _
        // Predicated region
        $region89: #{mean_autoencoder_forward.1} parent=79 // pred_check
          %p1127 = pneg %p340
        $region90: #{mean_autoencoder_forward.1} parent=79 // pred_check_branch
          %1129 = sbr.rel (%p1127) target = $region92
        $region91: #{mean_autoencoder_forward.1} parent=79 // pred_region
          %p1130 = scmp.lt.s32.totalorder %s29, 7
          %s1131 = scalar_select %p1130, %s29, 7
          %s1132 = scalar_lea.vmem %s13, %s1131
        $region92: #{mean_autoencoder_forward.1} parent=79 // pred_fallthru
          _
      $region80: #{mean_autoencoder_forward.1} parent=5 // pred_fallthru
        _
    $region6: #{mean_autoencoder_forward.1} parent=1 // loop_footer
      %s27 = sadd.s32 1, %s23
    $region7: #{mean_autoencoder_forward.1} parent=1 // loop_footer_branch
      %22 = sbr.rel target = $region3
    $region8: #{mean_autoencoder_forward.1} parent=1 // loop_exit
      _
    %1133 = vsyncpa [#allocation3], 1
    %s1134 = scalar_lea.sflag [#allocation3], 1
    %1135 = vsyncpa %s1134, 1

</llo_original>
